<compile_context>
chip_gen: v6e
topology: v6e:2x2x1
jax: 0.10.0
libtpu: 0.0.40
codegen_flags: <defaults>
</compile_context>

<pallas_src>
import functools

import jax
import jax.numpy as jnp
import numpy as np
from jax.experimental import pallas as pl
from jax.experimental.pallas import tpu as pltpu


def gc_block_kernel(q_ref, k_ref, v_ref, w_ref, out_ref, *, e_valid):
    # q/k/v/out blocks: (TB, C, Ep) f32 in VMEM; w: (1, C, 1) f32, resident.
    q = q_ref[...]
    k = k_ref[...]
    v = v_ref[...]
    w = w_ref[...]                                     # (1, C, 1)

    # 1x1 Conv1d over channels as broadcast-multiply + sublane reduce (no MXU matvec).
    logits = jnp.sum(w * k, axis=1, keepdims=True)     # (TB, 1, Ep)

    ep = logits.shape[-1]
    if e_valid != ep:
        # Mask padded lanes so they contribute exp(...) == 0 to every reduction.
        lane = jax.lax.broadcasted_iota(jnp.int32, logits.shape, dimension=2)
        logits = jnp.where(lane < e_valid, logits, jnp.float32(-1e30))

    # Softmax over E folded into unnormalized weights + a single EUP reciprocal.
    m = jnp.max(logits, axis=-1, keepdims=True)        # (TB, 1, 1)
    e = jnp.exp(logits - m)                            # (TB, 1, Ep); 0 on padded lanes
    denom = jnp.sum(e, axis=-1, keepdims=True)         # (TB, 1, 1)

    # context[b, c] = sum_e Q[b, c, e] * softmax(logits)[b, e]
    ctx_un = jnp.sum(q * e, axis=-1, keepdims=True)    # (TB, C, 1)  (VPU mul + XLU reduce)
    context = ctx_un * pl.reciprocal(denom, approx=True)

    out_ref[...] = (context * v).astype(out_ref.dtype)


def _choose_tb(B, C, E_pad, itemsize=4, block_budget_bytes=24 * 1024 * 1024):
    """Pick batches-per-block so double-buffered Q/K/V/out stay well inside VMEM
    on every generation (v7x has only 64 MiB), while keeping >=2 grid steps when
    possible so both v7x TensorCores get work."""
    per_batch = 4 * 2 * C * E_pad * itemsize           # 4 arrays x 2 pipeline buffers
    tb = max(1, min(B, block_budget_bytes // max(per_batch, 1)))
    if B >= 2:
        tb = min(tb, pl.cdiv(B, 2))
    return int(tb)


def gc_block_forward(Q, K, V, conv_mask_w, conv_mask_b=None):
    """Q, K, V: (B, C, E) float32. conv_mask_w: (1, C). conv_mask_b: (1,) (ignored:
    softmax over E is shift-invariant, so a scalar pre-softmax bias is a no-op)."""
    del conv_mask_b
    B, C, E = Q.shape

    # Lane-dense last dim: pad E up to a multiple of 128 (padded lanes masked in-kernel).
    Ep = ((E + 127) // 128) * 128
    TB = _choose_tb(B, C, Ep)
    Bp = pl.cdiv(B, TB) * TB

    def pad(x):
        return jnp.pad(x, ((0, Bp - B), (0, 0), (0, Ep - E)))

    Qp, Kp, Vp = pad(Q), pad(K), pad(V)
    w = conv_mask_w.reshape(1, C, 1).astype(jnp.float32)

    blk = pl.BlockSpec((TB, C, Ep), lambda b: (b, 0, 0))
    out = pl.pallas_call(
        functools.partial(gc_block_kernel, e_valid=E),
        out_shape=jax.ShapeDtypeStruct((Bp, C, Ep), Q.dtype),
        grid_spec=pltpu.PrefetchScalarGridSpec(
            num_scalar_prefetch=0,
            grid=(Bp // TB,),
            in_specs=[
                blk,                                          # Q
                blk,                                          # K
                blk,                                          # V
                pl.BlockSpec((1, C, 1), lambda b: (0, 0, 0)),  # conv_mask weight (resident)
            ],
            out_specs=blk,
        ),
        compiler_params=pltpu.CompilerParams(
            dimension_semantics=("parallel",),
            vmem_limit_bytes=64 * 1024 * 1024,
        ),
    )(Qp, Kp, Vp, w)
    return out[:B, :, :E]


def gc_block_reference(Q, K, V, conv_mask_w, conv_mask_b):
    # Pure-JAX reference mirroring the PyTorch forward (bias included; it cancels
    # in the softmax, which the kernel exploits).
    logits = jnp.einsum("oc,bce->boe", conv_mask_w, K) + conv_mask_b[None, :, None]
    p = jax.nn.softmax(logits, axis=2)                 # (B, 1, E)
    context = jnp.einsum("bce,boe->bco", Q, p)         # (B, C, 1)
    return context * V


if __name__ == "__main__":
    inplanes = 16          # C
    ratio = 1.0 / 16.0
    planes = int(inplanes * ratio)   # channel_add_conv weights exist in the module but
                                     # are never applied in forward (forward = context*V)
    B, C, E = 2, inplanes, 64

    key = jax.random.PRNGKey(0)
    kq, kk, kv, kw, kb = jax.random.split(key, 5)
    Q = jax.random.normal(kq, (B, C, E), dtype=jnp.float32)
    K = jax.random.normal(kk, (B, C, E), dtype=jnp.float32)
    V = jax.random.normal(kv, (B, C, E), dtype=jnp.float32)

    # conv_mask = nn.Conv1d(inplanes, 1, kernel_size=1): weight (1, C, 1) -> (1, C); bias (1,).
    conv_mask_w = (jax.random.normal(kw, (1, C), dtype=jnp.float32)
                   * (1.0 / np.sqrt(C)))
    conv_mask_b = jax.random.normal(kb, (1,), dtype=jnp.float32) * 0.1

    out = gc_block_forward(Q, K, V, conv_mask_w, conv_mask_b)
    out = jax.block_until_ready(out)

    ref = gc_block_reference(Q, K, V, conv_mask_w, conv_mask_b)
    # Tolerance loosened slightly vs 1e-5 because the kernel uses the approximate
    # EUP reciprocal for the softmax denominator (per perf review).
    np.testing.assert_allclose(np.asarray(out), np.asarray(ref),
                               rtol=5e-3, atol=5e-3)
    print("KERNEL_OK")
</pallas_src>

<mosaic_0001>
module attributes {stable_mosaic.version = 11 : i64} {
  func.func @gc_block_kernel(%arg0: i32, %arg1: memref<1x16x128xf32, #tpu.memory_space<vmem>>, %arg2: memref<1x16x128xf32, #tpu.memory_space<vmem>>, %arg3: memref<1x16x128xf32, #tpu.memory_space<vmem>>, %arg4: memref<1x16x1xf32, #tpu.memory_space<vmem>>, %arg5: memref<1x16x128xf32, #tpu.memory_space<vmem>>) attributes {dimension_semantics = [#tpu.dimension_semantics<parallel>], iteration_bounds = array<i64: 2>, scalar_prefetch = 0 : i64, scratch_operands = 0 : i64, tpu.core_type = #tpu.core_type<tc>, window_params = [{transform_indices = @transform_0, window_bounds = array<i64: 1, 16, 128>}, {transform_indices = @transform_1, window_bounds = array<i64: 1, 16, 128>}, {transform_indices = @transform_2, window_bounds = array<i64: 1, 16, 128>}, {pipeline_mode = #tpu.pipeline_mode<synchronous>, transform_indices = @transform_3, window_bounds = array<i64: 1, 16, 1>}, {transform_indices = @transform_4, window_bounds = array<i64: 1, 16, 128>}]} {
    %c0 = arith.constant 0 : index
    %c0_0 = arith.constant 0 : index
    %c0_1 = arith.constant 0 : index
    %0 = vector.load %arg1[%c0, %c0_0, %c0_1] : memref<1x16x128xf32, #tpu.memory_space<vmem>>, vector<1x16x128xf32>
    %c0_2 = arith.constant 0 : index
    %c0_3 = arith.constant 0 : index
    %c0_4 = arith.constant 0 : index
    %1 = vector.load %arg2[%c0_2, %c0_3, %c0_4] : memref<1x16x128xf32, #tpu.memory_space<vmem>>, vector<1x16x128xf32>
    %c0_5 = arith.constant 0 : index
    %c0_6 = arith.constant 0 : index
    %c0_7 = arith.constant 0 : index
    %2 = vector.load %arg3[%c0_5, %c0_6, %c0_7] : memref<1x16x128xf32, #tpu.memory_space<vmem>>, vector<1x16x128xf32>
    %c0_8 = arith.constant 0 : index
    %c0_9 = arith.constant 0 : index
    %c0_10 = arith.constant 0 : index
    %3 = vector.load %arg4[%c0_8, %c0_9, %c0_10] : memref<1x16x1xf32, #tpu.memory_space<vmem>>, vector<1x16x1xf32>
    %4 = vector.broadcast %3 : vector<1x16x1xf32> to vector<1x16x128xf32>
    %5 = arith.mulf %4, %1 : vector<1x16x128xf32>
    %cst = arith.constant dense<0.000000e+00> : vector<1x128xf32>
    %6 = vector.multi_reduction <add>, %5, %cst [1] : vector<1x16x128xf32> to vector<1x128xf32>
    %7 = vector.shape_cast %6 : vector<1x128xf32> to vector<1x1x128xf32>
    %8 = tpu.iota {dimensions = array<i32: 2>} : vector<1x1x128xi32>
    %c64_i32 = arith.constant 64 : i32
    %9 = vector.broadcast %c64_i32 : i32 to vector<1x1x128xi32>
    %10 = arith.cmpi slt, %8, %9 : vector<1x1x128xi32>
    %cst_11 = arith.constant -1.000000e+30 : f32
    %11 = vector.broadcast %cst_11 : f32 to vector<1x1x128xf32>
    %12 = arith.select %10, %7, %11 : vector<1x1x128xi1>, vector<1x1x128xf32>
    %cst_12 = arith.constant dense<0xFF800000> : vector<1x1xf32>
    %13 = vector.multi_reduction <maximumf>, %12, %cst_12 [2] : vector<1x1x128xf32> to vector<1x1xf32>
    %14 = vector.shape_cast %13 : vector<1x1xf32> to vector<1x1x1xf32>
    %15 = vector.broadcast %14 : vector<1x1x1xf32> to vector<1x1x128xf32>
    %16 = arith.subf %12, %15 : vector<1x1x128xf32>
    %17 = math.exp %16 : vector<1x1x128xf32>
    %cst_13 = arith.constant dense<0.000000e+00> : vector<1x1xf32>
    %18 = vector.multi_reduction <add>, %17, %cst_13 [2] : vector<1x1x128xf32> to vector<1x1xf32>
    %19 = vector.shape_cast %18 : vector<1x1xf32> to vector<1x1x1xf32>
    %20 = vector.broadcast %17 : vector<1x1x128xf32> to vector<1x16x128xf32>
    %21 = arith.mulf %0, %20 : vector<1x16x128xf32>
    %cst_14 = arith.constant dense<0.000000e+00> : vector<1x16xf32>
    %22 = vector.multi_reduction <add>, %21, %cst_14 [2] : vector<1x16x128xf32> to vector<1x16xf32>
    %23 = vector.shape_cast %22 : vector<1x16xf32> to vector<1x16x1xf32>
    %24 = tpu.reciprocal %19 {approx = true} : vector<1x1x1xf32> -> vector<1x1x1xf32>
    %25 = vector.broadcast %24 : vector<1x1x1xf32> to vector<1x16x1xf32>
    %26 = arith.mulf %23, %25 : vector<1x16x1xf32>
    %27 = vector.broadcast %26 : vector<1x16x1xf32> to vector<1x16x128xf32>
    %28 = arith.mulf %27, %2 : vector<1x16x128xf32>
    %c0_15 = arith.constant 0 : index
    %c0_16 = arith.constant 0 : index
    %c0_17 = arith.constant 0 : index
    %29 = vector.load %arg5[%c0_15, %c0_16, %c0_17] : memref<1x16x128xf32, #tpu.memory_space<vmem>>, vector<1x16x128xf32>
    tpu.vector_store %arg5[%c0_15, %c0_16, %c0_17], %28 {strides = array<i32>} : memref<1x16x128xf32, #tpu.memory_space<vmem>>, vector<1x16x128xf32>,
    return
  }
  func.func @transform_0(%arg0: i32) -> (i32, i32, i32) {
    %c0_i32 = arith.constant 0 : i32
    %c0_i32_0 = arith.constant 0 : i32
    %c0_i32_1 = arith.constant 0 : i32
    return %arg0, %c0_i32, %c0_i32_0 : i32, i32, i32
  }
  func.func @transform_1(%arg0: i32) -> (i32, i32, i32) {
    %c0_i32 = arith.constant 0 : i32
    %c0_i32_0 = arith.constant 0 : i32
    %c0_i32_1 = arith.constant 0 : i32
    return %arg0, %c0_i32, %c0_i32_0 : i32, i32, i32
  }
  func.func @transform_2(%arg0: i32) -> (i32, i32, i32) {
    %c0_i32 = arith.constant 0 : i32
    %c0_i32_0 = arith.constant 0 : i32
    %c0_i32_1 = arith.constant 0 : i32
    return %arg0, %c0_i32, %c0_i32_0 : i32, i32, i32
  }
  func.func @transform_3(%arg0: i32) -> (i32, i32, i32) {
    %c0_i32 = arith.constant 0 : i32
    %c0_i32_0 = arith.constant 0 : i32
    %c0_i32_1 = arith.constant 0 : i32
    %c0_i32_2 = arith.constant 0 : i32
    return %c0_i32, %c0_i32_0, %c0_i32_1 : i32, i32, i32
  }
  func.func @transform_4(%arg0: i32) -> (i32, i32, i32) {
    %c0_i32 = arith.constant 0 : i32
    %c0_i32_0 = arith.constant 0 : i32
    %c0_i32_1 = arith.constant 0 : i32
    return %arg0, %c0_i32, %c0_i32_0 : i32, i32, i32
  }
}

</mosaic_0001>

<llo_original>
// kernel: tpu_custom_call.1
$region0: #{tpu_custom_call.1}
  #allocation0 [shape = 'u32[]', space=smem, size = 0x4, offset = 0x4, fixed_abs, tag = 'smem constant byte address 0x4 - core index']
  #allocation1 [shape = 'u32[144,128]{1,0:T(1,128)}', space=vmem, size = 0x12000, scoped, tag = 'internal scratch']
  %s0 = inlined_call_operand.hbm [shape: f32[2,16,128], index: 0, kind: input, shape index: {}]
  %s1 = inlined_call_operand.hbm [shape: f32[2,16,128], index: 1, kind: input, shape index: {}]
  %s2 = inlined_call_operand.hbm [shape: f32[2,16,128], index: 2, kind: input, shape index: {}]
  %s3 = inlined_call_operand.vmem [shape: f32[1,16,1], index: 3, kind: input, shape index: {}]
  %s4 = inlined_call_operand.hbm [shape: f32[2,16,128], index: 4, kind: output, shape index: {}]
  %s5 = sld [smem:[#allocation0]]
  $region61: #{tpu_custom_call.1} parent=0
    _
  %s7 = ssub.s32 1, %s5
  %s8 = scalar_select 0, %s7, %s5
  $region1: #{tpu_custom_call.1} parent=0
    #allocation2 [shape = 'u8[16384]{0}', space=vmem, size = 0x4000, scoped, tag = 'input window, operand 0']
    #allocation3 [shape = 's32[2]{0}', space=sflag, size = 0x8, scoped, tag = 'scoped memory for tpu_custom_call.1']
    #allocation4 [shape = 's32[2]{0}', space=sflag, size = 0x8, scoped, tag = 'scoped memory for tpu_custom_call.1']
    #allocation5 [shape = 'u8[16384]{0}', space=vmem, size = 0x4000, scoped, tag = 'input window, operand 1']
    #allocation6 [shape = 's32[2]{0}', space=sflag, size = 0x8, scoped, tag = 'scoped memory for tpu_custom_call.1']
    #allocation7 [shape = 'u8[16384]{0}', space=vmem, size = 0x4000, scoped, tag = 'input window, operand 2']
    #allocation8 [shape = 'u8[16384]{0}', space=vmem, size = 0x4000, scoped, tag = 'output window, operand 0']
    %9 = vsyncpa [#allocation3], 0
    %s10 = scalar_lea.sflag [#allocation3], 1
    %11 = vsyncpa %s10, 0
    %12 = vsyncpa [#allocation6], 0
    %s13 = scalar_lea.sflag [#allocation6], 1
    %14 = vsyncpa %s13, 0
    %15 = vsyncpa [#allocation4], 0
    %s16 = scalar_lea.sflag [#allocation4], 1
    %17 = vsyncpa %s16, 0
    loop: start=0, step=1, limit=4
    $region2: #{tpu_custom_call.1} parent=1 // loop_pre_header
      _
    $region3: #{tpu_custom_call.1} parent=1 // loop_header
      %s19 = sphi 0, %s23
      %p20 = scmp.ge.s32.totalorder %s19, 4
      %s29 = sphi 0, %s31
      %s32 = sphi 0, %s29
      %s33 = sphi 0, %s32
      %s49 = sphi 0, %s33
      %s55 = sphi 0, %s57
      %s58 = sphi 0, %s55
      %s59 = sphi 0, %s58
      %s75 = sphi 0, %s59
      %s81 = sphi 0, %s83
      %s84 = sphi 0, %s81
      %s85 = sphi 0, %s84
      %s101 = sphi 0, %s85
      %s105 = sphi 0, %s105
      %s107 = sphi 0, %s105
      %s108 = sphi 0, %s107
      %s122 = sphi 0, %s108
      %s128 = sphi 0, %s130
      %s131 = sphi 0, %s128
      %s132 = sphi 0, %s131
      %s148 = sphi 0, %s132
    $region4: #{tpu_custom_call.1} parent=1 // loop_header_branch
      %22 = sbr.rel (%p20) target = $region8
    $region5: #{tpu_custom_call.1} parent=1 // loop_body
      %s24 = ssub.s32 %s19, 1
      %s25 = ssub.s32 %s19, 2
      %s26 = sadd.s32 %s19, 1
      %s27 = ssub.s32 %s19, %s26
      %p28 = scmp.eq.s32.totalorder %s27, 0
      %s30 = sadd.s32 %s29, 1
      %s31 = scalar_select %p28, %s29, %s30
      %p34 = pneg %p28
      %p35 = scmp.eq.s32.totalorder %s19, 1
      %p36 = por %p34, %p35
      %p37 = scmp.ne.s32.totalorder %s29, %s32
      %p38 = scmp.eq.s32.totalorder %s19, 0
      %p39 = por %p37, %p38
      %p40 = scmp.ne.s32.totalorder %s29, %s32
      %p41 = scmp.eq.s32.totalorder %s24, 1
      %p42 = por %p40, %p41
      %p43 = scmp.ne.s32.totalorder %s32, %s33
      %p44 = scmp.eq.s32.totalorder %s24, 0
      %p45 = por %p43, %p44
      %p46 = scmp.ne.s32.totalorder %s32, %s33
      %p47 = scmp.eq.s32.totalorder %s25, 1
      %p48 = por %p46, %p47
      %p50 = scmp.ne.s32.totalorder %s33, %s49
      %p51 = scmp.eq.s32.totalorder %s25, 0
      %p52 = por %p50, %p51
      %s53 = ssub.s32 %s19, %s26
      %p54 = scmp.eq.s32.totalorder %s53, 0
      %s56 = sadd.s32 %s55, 1
      %s57 = scalar_select %p54, %s55, %s56
      %p60 = pneg %p54
      %p61 = scmp.eq.s32.totalorder %s19, 1
      %p62 = por %p60, %p61
      %p63 = scmp.ne.s32.totalorder %s55, %s58
      %p64 = scmp.eq.s32.totalorder %s19, 0
      %p65 = por %p63, %p64
      %p66 = scmp.ne.s32.totalorder %s55, %s58
      %p67 = scmp.eq.s32.totalorder %s24, 1
      %p68 = por %p66, %p67
      %p69 = scmp.ne.s32.totalorder %s58, %s59
      %p70 = scmp.eq.s32.totalorder %s24, 0
      %p71 = por %p69, %p70
      %p72 = scmp.ne.s32.totalorder %s58, %s59
      %p73 = scmp.eq.s32.totalorder %s25, 1
      %p74 = por %p72, %p73
      %p76 = scmp.ne.s32.totalorder %s59, %s75
      %p77 = scmp.eq.s32.totalorder %s25, 0
      %p78 = por %p76, %p77
      %s79 = ssub.s32 %s19, %s26
      %p80 = scmp.eq.s32.totalorder %s79, 0
      %s82 = sadd.s32 %s81, 1
      %s83 = scalar_select %p80, %s81, %s82
      %p86 = pneg %p80
      %p87 = scmp.eq.s32.totalorder %s19, 1
      %p88 = por %p86, %p87
      %p89 = scmp.ne.s32.totalorder %s81, %s84
      %p90 = scmp.eq.s32.totalorder %s19, 0
      %p91 = por %p89, %p90
      %p92 = scmp.ne.s32.totalorder %s81, %s84
      %p93 = scmp.eq.s32.totalorder %s24, 1
      %p94 = por %p92, %p93
      %p95 = scmp.ne.s32.totalorder %s84, %s85
      %p96 = scmp.eq.s32.totalorder %s24, 0
      %p97 = por %p95, %p96
      %p98 = scmp.ne.s32.totalorder %s84, %s85
      %p99 = scmp.eq.s32.totalorder %s25, 1
      %p100 = por %p98, %p99
      %p102 = scmp.ne.s32.totalorder %s85, %s101
      %p103 = scmp.eq.s32.totalorder %s25, 0
      %p104 = por %p102, %p103
      %s106 = sadd.s32 %s105, 1
      %p109 = scmp.eq.s32.totalorder %s19, 1
      %p110 = scmp.ne.s32.totalorder %s105, %s107
      %p111 = scmp.eq.s32.totalorder %s19, 0
      %p112 = por %p110, %p111
      %p113 = scmp.ne.s32.totalorder %s105, %s107
      %p114 = scmp.eq.s32.totalorder %s24, 1
      %p115 = por %p113, %p114
      %p116 = scmp.ne.s32.totalorder %s107, %s108
      %p117 = scmp.eq.s32.totalorder %s24, 0
      %p118 = por %p116, %p117
      %p119 = scmp.ne.s32.totalorder %s107, %s108
      %p120 = scmp.eq.s32.totalorder %s25, 1
      %p121 = por %p119, %p120
      %p123 = scmp.ne.s32.totalorder %s108, %s122
      %p124 = scmp.eq.s32.totalorder %s25, 0
      %p125 = por %p123, %p124
      %s126 = ssub.s32 %s19, %s26
      %p127 = scmp.eq.s32.totalorder %s126, 0
      %s129 = sadd.s32 %s128, 1
      %s130 = scalar_select %p127, %s128, %s129
      %p133 = pneg %p127
      %p134 = scmp.eq.s32.totalorder %s19, 1
      %p135 = por %p133, %p134
      %p136 = scmp.ne.s32.totalorder %s128, %s131
      %p137 = scmp.eq.s32.totalorder %s19, 0
      %p138 = por %p136, %p137
      %p139 = scmp.ne.s32.totalorder %s128, %s131
      %p140 = scmp.eq.s32.totalorder %s24, 1
      %p141 = por %p139, %p140
      %p142 = scmp.ne.s32.totalorder %s131, %s132
      %p143 = scmp.eq.s32.totalorder %s24, 0
      %p144 = por %p142, %p143
      %p145 = scmp.ne.s32.totalorder %s131, %s132
      %p146 = scmp.eq.s32.totalorder %s25, 1
      %p147 = por %p145, %p146
      %p149 = scmp.ne.s32.totalorder %s132, %s148
      %p150 = scmp.eq.s32.totalorder %s25, 0
      %p151 = por %p149, %p150
      %p152 = scmp.le.s32.totalorder 1, %s19
      %p153 = scmp.lt.s32.totalorder %s19, 3
      %p154 = pnand %p152, %p153
      %p155 = pneg %p154
      // Predicated region
      $region9: #{tpu_custom_call.1} parent=5 // pred_check
        _
      $region10: #{tpu_custom_call.1} parent=5 // pred_check_branch
        %157 = sbr.rel (%p154) target = $region12
      $region11: #{tpu_custom_call.1} parent=5 // pred_region
        %s158 = ssub.s32 %s19, 1
        // Predicated region
        $region13: #{tpu_custom_call.1} parent=11 // pred_check
          %p159 = pneg %p118
        $region14: #{tpu_custom_call.1} parent=11 // pred_check_branch
          %161 = sbr.rel (%p159) target = $region16
        $region15: #{tpu_custom_call.1} parent=11 // pred_region
          _
        $region16: #{tpu_custom_call.1} parent=11 // pred_fallthru
          _
      $region12: #{tpu_custom_call.1} parent=5 // pred_fallthru
        _
      %p162 = scmp.lt.s32.totalorder %s19, 2
      // Predicated region
      $region17: #{tpu_custom_call.1} parent=5 // pred_check
        %p163 = pneg %p162
      $region18: #{tpu_custom_call.1} parent=5 // pred_check_branch
        %165 = sbr.rel (%p163) target = $region20
      $region19: #{tpu_custom_call.1} parent=5 // pred_region
        // Predicated region
        $region21: #{tpu_custom_call.1} parent=19 // pred_check
          %p166 = pneg %p39
        $region22: #{tpu_custom_call.1} parent=19 // pred_check_branch
          %168 = sbr.rel (%p166) target = $region24
        $region23: #{tpu_custom_call.1} parent=19 // pred_region
          %s169 = sand.u32 %s29, 1
          %s170 = scalar_lea.sflag [#allocation3], %s169
          %s171 = sand.u32 %s29, 1
          %s172 = smul.addr %s171, 16
          %s173 = scalar_lea.vmem [#allocation2], %s172
          %s175 = ssub.s32 256, 256
          %176 = vsyncadd %s170, %s175
          %s177 = smul.addr %s19, 2
          %s178 = smul.addr %s177, 128
          %s179 = scalar_lea.hbm %s0, %s178
          %s180 = sshll.u32 %s173, 4
          %s181 = int_to_ptr.vmem [resolvable:$true] %s180
          %186 = dma.hbm_to_vmem [thread:$0]  %s179, 256, %s181, %s170, 128, 128, 8
        $region24: #{tpu_custom_call.1} parent=19 // pred_fallthru
          _
        // Predicated region
        $region25: #{tpu_custom_call.1} parent=19 // pred_check
          %p187 = pneg %p65
        $region26: #{tpu_custom_call.1} parent=19 // pred_check_branch
          %189 = sbr.rel (%p187) target = $region28
        $region27: #{tpu_custom_call.1} parent=19 // pred_region
          %s190 = sand.u32 %s19, 1
          %s191 = scalar_lea.sflag [#allocation6], %s190
          %s192 = sand.u32 %s55, 1
          %s193 = smul.addr %s192, 16
          %s194 = scalar_lea.vmem [#allocation5], %s193
          %s196 = ssub.s32 256, 256
          %197 = vsyncadd %s191, %s196
          %s198 = smul.addr %s19, 2
          %s199 = smul.addr %s198, 128
          %s200 = scalar_lea.hbm %s1, %s199
          %s201 = sshll.u32 %s194, 4
          %s202 = int_to_ptr.vmem [resolvable:$true] %s201
          %207 = dma.hbm_to_vmem [thread:$0]  %s200, 256, %s202, %s191, 128, 128, 8
        $region28: #{tpu_custom_call.1} parent=19 // pred_fallthru
          _
        // Predicated region
        $region29: #{tpu_custom_call.1} parent=19 // pred_check
          %p208 = pneg %p91
        $region30: #{tpu_custom_call.1} parent=19 // pred_check_branch
          %210 = sbr.rel (%p208) target = $region32
        $region31: #{tpu_custom_call.1} parent=19 // pred_region
          %s211 = sand.u32 %s19, 1
          %s212 = scalar_lea.sflag [#allocation6], %s211
          %s213 = sand.u32 %s81, 1
          %s214 = smul.addr %s213, 16
          %s215 = scalar_lea.vmem [#allocation7], %s214
          %s217 = ssub.s32 256, 256
          %218 = vsyncadd %s212, %s217
          %s219 = smul.addr %s19, 2
          %s220 = smul.addr %s219, 128
          %s221 = scalar_lea.hbm %s2, %s220
          %s222 = sshll.u32 %s215, 4
          %s223 = int_to_ptr.vmem [resolvable:$true] %s222
          %228 = dma.hbm_to_vmem [thread:$0]  %s221, 256, %s223, %s212, 128, 128, 8
        $region32: #{tpu_custom_call.1} parent=19 // pred_fallthru
          _
      $region20: #{tpu_custom_call.1} parent=5 // pred_fallthru
        _
      %p229 = scmp.le.s32.totalorder 1, %s19
      %p230 = scmp.lt.s32.totalorder %s19, 3
      %p231 = pnand %p229, %p230
      %p232 = pneg %p231
      // Predicated region
      $region33: #{tpu_custom_call.1} parent=5 // pred_check
        _
      $region34: #{tpu_custom_call.1} parent=5 // pred_check_branch
        %234 = sbr.rel (%p231) target = $region36
      $region35: #{tpu_custom_call.1} parent=5 // pred_region
        %s235 = ssub.s32 %s19, 1
        %s236 = sand.u32 %s32, 1
        %s237 = scalar_lea.sflag [#allocation3], %s236
        %s238 = sand.u32 %s32, 1
        %s239 = smul.addr %s238, 16
        %s240 = scalar_lea.vmem [#allocation2], %s239
        // Predicated region
        $region37: #{tpu_custom_call.1} parent=35 // pred_check
          %p241 = pneg %p45
        $region38: #{tpu_custom_call.1} parent=35 // pred_check_branch
          %243 = sbr.rel (%p241) target = $region40
        $region39: #{tpu_custom_call.1} parent=35 // pred_region
          %244 = dma.done %s237, 256
        $region40: #{tpu_custom_call.1} parent=35 // pred_fallthru
          _
        %s245 = sand.u32 %s24, 1
        %s246 = scalar_lea.sflag [#allocation6], %s245
        %s247 = sand.u32 %s58, 1
        %s248 = smul.addr %s247, 16
        %s249 = scalar_lea.vmem [#allocation5], %s248
        // Predicated region
        $region41: #{tpu_custom_call.1} parent=35 // pred_check
          %p250 = pneg %p71
        $region42: #{tpu_custom_call.1} parent=35 // pred_check_branch
          %252 = sbr.rel (%p250) target = $region44
        $region43: #{tpu_custom_call.1} parent=35 // pred_region
          %253 = dma.done %s246, 256
        $region44: #{tpu_custom_call.1} parent=35 // pred_fallthru
          _
        %s254 = sand.u32 %s24, 1
        %s255 = scalar_lea.sflag [#allocation6], %s254
        %s256 = sand.u32 %s84, 1
        %s257 = smul.addr %s256, 16
        %s258 = scalar_lea.vmem [#allocation7], %s257
        // Predicated region
        $region45: #{tpu_custom_call.1} parent=35 // pred_check
          %p259 = pneg %p97
        $region46: #{tpu_custom_call.1} parent=35 // pred_check_branch
          %261 = sbr.rel (%p259) target = $region48
        $region47: #{tpu_custom_call.1} parent=35 // pred_region
          %262 = dma.done %s255, 256
        $region48: #{tpu_custom_call.1} parent=35 // pred_fallthru
          _
        %s263 = sand.u32 %s32, 1
        %s264 = scalar_lea.sflag [#allocation3], %s263
        %s265 = sand.u32 %s32, 1
        %s266 = smul.addr %s265, 16
        %s267 = scalar_lea.vmem [#allocation2], %s266
        %p268 = pneg %p45
        %p269 = pneg %p42
        %s270 = sand.u32 %s24, 1
        %s271 = scalar_lea.sflag [#allocation6], %s270
        %s272 = sand.u32 %s58, 1
        %s273 = smul.addr %s272, 16
        %s274 = scalar_lea.vmem [#allocation5], %s273
        %p275 = pneg %p71
        %p276 = pneg %p68
        %s277 = sand.u32 %s24, 1
        %s278 = scalar_lea.sflag [#allocation6], %s277
        %s279 = sand.u32 %s84, 1
        %s280 = smul.addr %s279, 16
        %s281 = scalar_lea.vmem [#allocation7], %s280
        %p282 = pneg %p97
        %p283 = pneg %p94
        %p284 = pneg %p118
        %p285 = pneg %p115
        %p286 = pneg %p144
        %p287 = pneg %p141
        %s288 = sand.u32 %s131, 1
        %s289 = scalar_lea.sflag [#allocation4], %s288
        %s290 = sand.u32 %s131, 1
        %s291 = smul.addr %s290, 16
        %s292 = scalar_lea.vmem [#allocation8], %s291
        %v293 = vld [vmem:[%s240] sm:$0xff]
        %v294 = vld [vmem:[%s240 + $0x8] sm:$0xff]
        %v295 = vld [vmem:[%s249] sm:$0xff]
        %v296 = vld [vmem:[%s249 + $0x8] sm:$0xff]
        %v297 = vld [vmem:[%s258] sm:$0xff]
        %v298 = vld [vmem:[%s258 + $0x8] sm:$0xff]
        %v299 = vld [vmem:[%s3] sm:$0xff]
        %v300 = vld [vmem:[%s3 + $0x8] sm:$0xff]
        %302 = vset.pattern.permute.xlu0 0
        %303 = vperm.xlu0 %302, %v299
        %v304 = vpop.permute.xlu0 %303
        %307 = vset.pattern.permute.xlu0 0
        %308 = vperm.xlu0 %307, %v300
        %v309 = vpop.permute.xlu0 %308
        %v311 = vmul.f32 %v304, %v295
        %v312 = vmul.f32 %v309, %v296
        %v313 = vadd.f32 %v311, %v312
        %v314 = vrot.slane %v313, 4
        %v315 = vadd.f32 %v313, %v314
        %v316 = vrot.slane %v315, 2
        %v317 = vadd.f32 %v315, %v316
        %v318 = vrot.slane %v317, 1
        %v319 = vadd.f32 %v317, %v318
        %v320 = vlaneseq
        %v321 = vand.u32 %v320, 127
        %vm322 = vcmp.lt.s32.totalorder %v321, 64
        %v323 = vsel %vm322, %v319, -1e+30
        %324 = vmax.xlane.f32.xlu0 %v323
        %v325 = vpop.xlane.xlu0 %324
        %v326 = vsub.f32 %v323, %v325
        %v327 = vmul.f32 %v326, 1.442695
        %v328 = vpow.pop %v327
        %329 = vadd.xlane.f32.xlu0 %v328
        %v330 = vpop.xlane.xlu0 %329
        %v331 = vmul.f32 %v293, %v328
        %v332 = vmul.f32 %v294, %v328
        %333 = vadd.xlane.f32.xlu0 %v331
        %v334 = vpop.xlane.xlu0 %333
        %335 = vadd.xlane.f32.xlu0 %v332
        %v336 = vpop.xlane.xlu0 %335
        %v337 = vrcp.pop %v330
        %v338 = vmul.f32 %v334, %v337
        %v339 = vmul.f32 %v336, %v337
        %v340 = vmul.f32 %v338, %v297
        %v341 = vmul.f32 %v339, %v298
        %342 = vst [vmem:[%s292] sm:$0xff] %v340
        %343 = vst [vmem:[%s292 + $0x8] sm:$0xff] %v341
        %s344 = sand.u32 %s131, 1
        %s345 = scalar_lea.sflag [#allocation4], %s344
        %s346 = sand.u32 %s131, 1
        %s347 = smul.addr %s346, 16
        %s348 = scalar_lea.vmem [#allocation8], %s347
        // Predicated region
        $region49: #{tpu_custom_call.1} parent=35 // pred_check
          %p349 = pneg %p141
        $region50: #{tpu_custom_call.1} parent=35 // pred_check_branch
          %351 = sbr.rel (%p349) target = $region52
        $region51: #{tpu_custom_call.1} parent=35 // pred_region
          %s353 = ssub.s32 256, 256
          %354 = vsyncadd %s345, %s353
          %s355 = smul.addr %s24, 2
          %s356 = smul.addr %s355, 128
          %s357 = scalar_lea.hbm %s4, %s356
          %s358 = sshll.u32 %s348, 4
          %s359 = int_to_ptr.vmem [resolvable:$true] %s358
          %364 = dma.vmem_to_hbm [thread:$0]  %s359, 256, %s357, %s345, 128, 128, 8
        $region52: #{tpu_custom_call.1} parent=35 // pred_fallthru
          _
      $region36: #{tpu_custom_call.1} parent=5 // pred_fallthru
        _
      %p365 = scmp.le.s32.totalorder 2, %s19
      // Predicated region
      $region53: #{tpu_custom_call.1} parent=5 // pred_check
        %p366 = pneg %p365
      $region54: #{tpu_custom_call.1} parent=5 // pred_check_branch
        %368 = sbr.rel (%p366) target = $region56
      $region55: #{tpu_custom_call.1} parent=5 // pred_region
        %s369 = ssub.s32 %s19, 2
        // Predicated region
        $region57: #{tpu_custom_call.1} parent=55 // pred_check
          %p370 = pneg %p147
        $region58: #{tpu_custom_call.1} parent=55 // pred_check_branch
          %372 = sbr.rel (%p370) target = $region60
        $region59: #{tpu_custom_call.1} parent=55 // pred_region
          %s373 = sand.u32 %s132, 1
          %s374 = scalar_lea.sflag [#allocation4], %s373
          %s375 = sand.u32 %s132, 1
          %s376 = smul.addr %s375, 16
          %s377 = scalar_lea.vmem [#allocation8], %s376
          %378 = dma.done %s374, 256
        $region60: #{tpu_custom_call.1} parent=55 // pred_fallthru
          _
      $region56: #{tpu_custom_call.1} parent=5 // pred_fallthru
        _
    $region6: #{tpu_custom_call.1} parent=1 // loop_footer
      %s23 = sadd.s32 1, %s19
    $region7: #{tpu_custom_call.1} parent=1 // loop_footer_branch
      %18 = sbr.rel target = $region3
    $region8: #{tpu_custom_call.1} parent=1 // loop_exit
      _
    %379 = vsyncpa [#allocation3], 1
    %s380 = scalar_lea.sflag [#allocation3], 1
    %381 = vsyncpa %s380, 1
    %382 = vsyncpa [#allocation6], 1
    %s383 = scalar_lea.sflag [#allocation6], 1
    %384 = vsyncpa %s383, 1
    %385 = vsyncpa [#allocation4], 1
    %s386 = scalar_lea.sflag [#allocation4], 1
    %387 = vsyncpa %s386, 1

</llo_original>
